<compile_context>
chip_gen: v7x
topology: tpu7x:2x2x1
jax: 0.10.0
libtpu: 0.0.40
codegen_flags: <defaults>
</compile_context>

<pallas_src>
import functools

import jax
import jax.numpy as jnp
from jax.experimental import pallas as pl
from jax.experimental.pallas import tpu as pltpu


def _flowhead_kernel(x_ref, w1_ref, b1_ref, w2_ref, b2_ref, out_ref, *, H, W):
    """Processes NB batch elements per grid step.

    x_ref  : (NB, Cin_pad, H*W)   input; channels on sublanes, spatial on lanes
    w1_ref : (hidden, 9*Cin_pad)  conv1 weights, K ordered (dy, dx, cin)
    b1_ref : (hidden, 1)
    w2_ref : (18, hidden)         conv2 weights, rows ordered ((dy,dx), cout)
    b2_ref : (2, 1)
    out_ref: (NB, 2, H*W)
    """
    NB = x_ref.shape[0]
    HW = H * W

    # Static per-position validity masks + roll shifts for the 9 taps (dy, dx).
    # Computed once per grid step, shared by both convolutions and all NB
    # batch elements.  `None` mask means the tap is valid everywhere (centre).
    pos = jax.lax.broadcasted_iota(jnp.int32, (1, HW), 1)
    wcol = pos % W
    shifts = []
    masks = []
    for dy in range(3):
        for dx in range(3):
            s = (dy - 1) * W + (dx - 1)
            conds = []
            if dy == 0:
                conds.append(pos >= W)                 # h - 1 >= 0
            elif dy == 2:
                conds.append(pos < (H - 1) * W)        # h + 1 <= H - 1
            if dx == 0:
                conds.append(wcol >= 1)                # w - 1 >= 0
            elif dx == 2:
                conds.append(wcol <= W - 2)            # w + 1 <= W - 1
            m = None
            for c in conds:
                m = c if m is None else jnp.logical_and(m, c)
            shifts.append((-s) % HW)
            masks.append(m)

    def roll_mask(v, t):
        # v: (C, HW).  tap value at lane p becomes v[:, p + s] (zero outside).
        sh = shifts[t]
        r = v if sh == 0 else pltpu.roll(v, shift=sh, axis=1)
        m = masks[t]
        return r if m is None else jnp.where(m, r, 0.0)

    w1 = w1_ref[...]
    b1 = b1_ref[...]
    w2 = w2_ref[...]
    b2 = b2_ref[...]

    for b in range(NB):
        x = x_ref[b].astype(jnp.float32)                       # (Cin_pad, HW)

        # ---- conv1 (3x3, pad=1) + bias + ReLU: one MXU matmul, K = 9*Cin_pad
        taps = jnp.concatenate([roll_mask(x, t) for t in range(9)], axis=0)
        h = jnp.dot(w1, taps, preferred_element_type=jnp.float32)
        h = jnp.maximum(h + b1, 0.0)                            # (hidden, HW)

        # ---- conv2 (3x3, pad=1): one matmul, then shift the small products.
        # P[(t*2 + co), :] = sum_c w2[co, c, dy, dx] * h[c, :]; by linearity
        # out = sum_t mask_t ∘ roll(P_t, shift_t) + b2.
        P = jnp.dot(w2, h, preferred_element_type=jnp.float32)  # (18, HW)
        o = None
        for t in range(9):
            contrib = roll_mask(P[2 * t:2 * t + 2, :], t)       # (2, HW)
            o = contrib if o is None else o + contrib
        out_ref[b] = (o + b2).astype(out_ref.dtype)             # (2, HW)


def pack_flow_head_params(w1_oihw, b1, w2_oihw, b2):
    """Pack PyTorch OIHW conv weights once (hoisted out of the per-call path)."""
    hidden, cin = w1_oihw.shape[0], w1_oihw.shape[1]
    cin_pad = -(-cin // 8) * 8          # round up to an aligned 8-sublane slab

    # conv1: (hidden, cin, 3, 3) -> (hidden, 3, 3, cin) -> pad cin -> (hidden, 9*cin_pad)
    w1p = jnp.transpose(w1_oihw, (0, 2, 3, 1))
    if cin_pad > cin:
        w1p = jnp.pad(w1p, ((0, 0), (0, 0), (0, 0), (0, cin_pad - cin)))
    w1p = w1p.reshape(hidden, 9 * cin_pad)

    # conv2: (2, hidden, 3, 3) -> (3, 3, 2, hidden) -> (18, hidden);
    # row index = (dy*3 + dx)*2 + cout, matching the in-kernel tap slices.
    w2p = jnp.transpose(w2_oihw, (2, 3, 0, 1)).reshape(9 * 2, hidden)

    return dict(
        w1p=w1p,
        b1c=b1.reshape(hidden, 1),
        w2p=w2p,
        b2c=b2.reshape(2, 1),
        cin=int(cin),
        cin_pad=int(cin_pad),
        hidden=int(hidden),
    )


def flow_head_pallas(x_nchw, packed):
    """x_nchw: (N, Cin, H, W) f32, packed = pack_flow_head_params(...) -> (N, 2, H, W)."""
    N, Cin, H, W = x_nchw.shape
    hidden = packed["hidden"]
    cin_pad = packed["cin_pad"]
    HW = H * W

    # Lane-dense, NCHW-native reshape (contiguous -> free), then pad channels
    # to an aligned slab (zeros; matching weight columns are zero too).
    x2d = x_nchw.reshape(N, Cin, HW)
    if cin_pad > Cin:
        x2d = jnp.pad(x2d, ((0, 0), (0, cin_pad - Cin), (0, 0)))

    # Collapse the batch grid: at most 2 chunks (keeps both v7x TensorCores
    # busy for N >= 2, and costs <= 2 grid steps on single-TC chips).
    grid_n = min(N, 2)
    nb = pl.cdiv(N, grid_n)
    n_pad = grid_n * nb
    if n_pad > N:
        x2d = jnp.pad(x2d, ((0, n_pad - N), (0, 0), (0, 0)))

    kernel = functools.partial(_flowhead_kernel, H=H, W=W)

    flops = 2 * HW * (9 * cin_pad * hidden + hidden * 18 + 9 * 2) * n_pad
    bytes_accessed = 4 * (n_pad * cin_pad * HW + hidden * 9 * cin_pad + hidden
                          + 18 * hidden + 2 + n_pad * 2 * HW)

    out2d = pl.pallas_call(
        kernel,
        out_shape=jax.ShapeDtypeStruct((n_pad, 2, HW), jnp.float32),
        grid_spec=pltpu.PrefetchScalarGridSpec(
            num_scalar_prefetch=0,
            grid=(grid_n,),
            in_specs=[
                pl.BlockSpec((nb, cin_pad, HW), lambda n: (n, 0, 0)),
                pl.BlockSpec((hidden, 9 * cin_pad), lambda n: (0, 0)),
                pl.BlockSpec((hidden, 1), lambda n: (0, 0)),
                pl.BlockSpec((18, hidden), lambda n: (0, 0)),
                pl.BlockSpec((2, 1), lambda n: (0, 0)),
            ],
            out_specs=pl.BlockSpec((nb, 2, HW), lambda n: (n, 0, 0)),
        ),
        compiler_params=pltpu.CompilerParams(
            dimension_semantics=("parallel",)),
        cost_estimate=pl.CostEstimate(
            flops=flops, transcendentals=0, bytes_accessed=bytes_accessed),
    )(x2d, packed["w1p"], packed["b1c"], packed["w2p"], packed["b2c"])

    # (n_pad, 2, H*W) -> (N, 2, H, W): drop batch padding, contiguous reshape.
    return out2d[:N].reshape(N, 2, H, W)


def flow_head_reference(x_nchw, w1_oihw, b1, w2_oihw, b2):
    """Pure-JAX reference (matches PyTorch nn.Conv2d semantics, NCHW)."""
    dn = jax.lax.conv_dimension_numbers(x_nchw.shape, w1_oihw.shape,
                                        ("NCHW", "OIHW", "NCHW"))
    h = jax.lax.conv_general_dilated(x_nchw, w1_oihw, (1, 1),
                                     ((1, 1), (1, 1)), dimension_numbers=dn)
    h = h + b1.reshape(1, -1, 1, 1)
    h = jnp.maximum(h, 0.0)
    dn2 = jax.lax.conv_dimension_numbers(h.shape, w2_oihw.shape,
                                         ("NCHW", "OIHW", "NCHW"))
    o = jax.lax.conv_general_dilated(h, w2_oihw, (1, 1),
                                     ((1, 1), (1, 1)), dimension_numbers=dn2)
    return o + b2.reshape(1, -1, 1, 1)


if __name__ == "__main__":
    # Shapes consistent with FlowHead(in_channels=4, hidden_size=32).
    N, Cin, H, W = 2, 4, 16, 16
    hidden = 32

    key = jax.random.PRNGKey(0)
    kx, k1, kb1, k2, kb2 = jax.random.split(key, 5)

    x = jax.random.normal(kx, (N, Cin, H, W), dtype=jnp.float32)
    w1 = jax.random.normal(k1, (hidden, Cin, 3, 3), dtype=jnp.float32) * 0.1
    b1 = jax.random.normal(kb1, (hidden,), dtype=jnp.float32) * 0.1
    w2 = jax.random.normal(k2, (2, hidden, 3, 3), dtype=jnp.float32) * 0.1
    b2 = jax.random.normal(kb2, (2,), dtype=jnp.float32) * 0.1

    # Pack weights once (reused across all RAFT GRU iterations).
    packed = jax.tree_util.tree_map(
        lambda v: jax.block_until_ready(v) if isinstance(v, jax.Array) else v,
        pack_flow_head_params(w1, b1, w2, b2))

    out = jax.block_until_ready(flow_head_pallas(x, packed))
    ref = jax.block_until_ready(flow_head_reference(x, w1, b1, w2, b2))

    assert out.shape == (N, 2, H, W), out.shape
    max_err = float(jnp.max(jnp.abs(out - ref)))
    assert jnp.allclose(out, ref, atol=1e-4, rtol=1e-4), max_err

    print("KERNEL_OK")
</pallas_src>

<mosaic_0001>
module attributes {stable_mosaic.version = 11 : i64} {
  func.func @_flowhead_kernel(%arg0: i32, %arg1: memref<1x8x256xf32, #tpu.memory_space<vmem>>, %arg2: memref<32x72xf32, #tpu.memory_space<vmem>>, %arg3: memref<32x1xf32, #tpu.memory_space<vmem>>, %arg4: memref<18x32xf32, #tpu.memory_space<vmem>>, %arg5: memref<2x1xf32, #tpu.memory_space<vmem>>, %arg6: memref<1x2x256xf32, #tpu.memory_space<vmem>>) attributes {dimension_semantics = [#tpu.dimension_semantics<parallel>], iteration_bounds = array<i64: 2>, scalar_prefetch = 0 : i64, scratch_operands = 0 : i64, tpu.core_type = #tpu.core_type<tc>, window_params = [{transform_indices = @transform_0, window_bounds = array<i64: 1, 8, 256>}, {pipeline_mode = #tpu.pipeline_mode<synchronous>, transform_indices = @transform_1, window_bounds = array<i64: 32, 72>}, {pipeline_mode = #tpu.pipeline_mode<synchronous>, transform_indices = @transform_2, window_bounds = array<i64: 32, 1>}, {pipeline_mode = #tpu.pipeline_mode<synchronous>, transform_indices = @transform_3, window_bounds = array<i64: 18, 32>}, {pipeline_mode = #tpu.pipeline_mode<synchronous>, transform_indices = @transform_4, window_bounds = array<i64: 2, 1>}, {transform_indices = @transform_5, window_bounds = array<i64: 1, 2, 256>}]} {
    %0 = tpu.iota {dimensions = array<i32: 1>} : vector<1x256xi32>
    %c16_i32 = arith.constant 16 : i32
    %c0_i32 = arith.constant 0 : i32
    %1 = arith.cmpi eq, %c16_i32, %c0_i32 : i32
    %c1_i32 = arith.constant 1 : i32
    %2 = arith.select %1, %c1_i32, %c16_i32 : i32
    %3 = vector.broadcast %2 : i32 to vector<1x256xi32>
    %4 = arith.remsi %0, %3 : vector<1x256xi32>
    %c0_i32_0 = arith.constant 0 : i32
    %5 = vector.broadcast %c0_i32_0 : i32 to vector<1x256xi32>
    %6 = arith.cmpi ne, %4, %5 : vector<1x256xi32>
    %c0_i32_1 = arith.constant 0 : i32
    %7 = vector.broadcast %c0_i32_1 : i32 to vector<1x256xi32>
    %8 = arith.cmpi slt, %4, %7 : vector<1x256xi32>
    %c0_i32_2 = arith.constant 0 : i32
    %9 = arith.cmpi slt, %2, %c0_i32_2 : i32
    %10 = vector.broadcast %9 : i1 to vector<1x256xi1>
    %11 = vector.broadcast %10 : vector<1x256xi1> to vector<1x256xi1>
    %12 = arith.xori %8, %11 : vector<1x256xi1>
    %13 = arith.andi %12, %6 : vector<1x256xi1>
    %14 = vector.broadcast %2 : i32 to vector<1x256xi32>
    %15 = arith.addi %4, %14 : vector<1x256xi32>
    %16 = arith.select %13, %15, %4 : vector<1x256xi1>, vector<1x256xi32>
    %c16_i32_3 = arith.constant 16 : i32
    %17 = vector.broadcast %c16_i32_3 : i32 to vector<1x256xi32>
    %18 = arith.cmpi sge, %0, %17 : vector<1x256xi32>
    %c1_i32_4 = arith.constant 1 : i32
    %19 = vector.broadcast %c1_i32_4 : i32 to vector<1x256xi32>
    %20 = arith.cmpi sge, %16, %19 : vector<1x256xi32>
    %21 = arith.andi %18, %20 : vector<1x256xi1>
    %c16_i32_5 = arith.constant 16 : i32
    %22 = vector.broadcast %c16_i32_5 : i32 to vector<1x256xi32>
    %23 = arith.cmpi sge, %0, %22 : vector<1x256xi32>
    %c16_i32_6 = arith.constant 16 : i32
    %24 = vector.broadcast %c16_i32_6 : i32 to vector<1x256xi32>
    %25 = arith.cmpi sge, %0, %24 : vector<1x256xi32>
    %c14_i32 = arith.constant 14 : i32
    %26 = vector.broadcast %c14_i32 : i32 to vector<1x256xi32>
    %27 = arith.cmpi sle, %16, %26 : vector<1x256xi32>
    %28 = arith.andi %25, %27 : vector<1x256xi1>
    %c1_i32_7 = arith.constant 1 : i32
    %29 = vector.broadcast %c1_i32_7 : i32 to vector<1x256xi32>
    %30 = arith.cmpi sge, %16, %29 : vector<1x256xi32>
    %c14_i32_8 = arith.constant 14 : i32
    %31 = vector.broadcast %c14_i32_8 : i32 to vector<1x256xi32>
    %32 = arith.cmpi sle, %16, %31 : vector<1x256xi32>
    %c240_i32 = arith.constant 240 : i32
    %33 = vector.broadcast %c240_i32 : i32 to vector<1x256xi32>
    %34 = arith.cmpi slt, %0, %33 : vector<1x256xi32>
    %c1_i32_9 = arith.constant 1 : i32
    %35 = vector.broadcast %c1_i32_9 : i32 to vector<1x256xi32>
    %36 = arith.cmpi sge, %16, %35 : vector<1x256xi32>
    %37 = arith.andi %34, %36 : vector<1x256xi1>
    %c240_i32_10 = arith.constant 240 : i32
    %38 = vector.broadcast %c240_i32_10 : i32 to vector<1x256xi32>
    %39 = arith.cmpi slt, %0, %38 : vector<1x256xi32>
    %c240_i32_11 = arith.constant 240 : i32
    %40 = vector.broadcast %c240_i32_11 : i32 to vector<1x256xi32>
    %41 = arith.cmpi slt, %0, %40 : vector<1x256xi32>
    %c14_i32_12 = arith.constant 14 : i32
    %42 = vector.broadcast %c14_i32_12 : i32 to vector<1x256xi32>
    %43 = arith.cmpi sle, %16, %42 : vector<1x256xi32>
    %44 = arith.andi %41, %43 : vector<1x256xi1>
    %c0 = arith.constant 0 : index
    %c0_13 = arith.constant 0 : index
    %45 = vector.load %arg2[%c0, %c0_13] : memref<32x72xf32, #tpu.memory_space<vmem>>, vector<32x72xf32>
    %c0_14 = arith.constant 0 : index
    %c0_15 = arith.constant 0 : index
    %46 = vector.load %arg3[%c0_14, %c0_15] : memref<32x1xf32, #tpu.memory_space<vmem>>, vector<32x1xf32>
    %c0_16 = arith.constant 0 : index
    %c0_17 = arith.constant 0 : index
    %47 = vector.load %arg4[%c0_16, %c0_17] : memref<18x32xf32, #tpu.memory_space<vmem>>, vector<18x32xf32>
    %c0_18 = arith.constant 0 : index
    %c0_19 = arith.constant 0 : index
    %48 = vector.load %arg5[%c0_18, %c0_19] : memref<2x1xf32, #tpu.memory_space<vmem>>, vector<2x1xf32>
    %c0_20 = arith.constant 0 : index
    %c0_21 = arith.constant 0 : index
    %c0_22 = arith.constant 0 : index
    %49 = vector.load %arg1[%c0_20, %c0_21, %c0_22] : memref<1x8x256xf32, #tpu.memory_space<vmem>>, vector<1x8x256xf32>
    %50 = vector.shape_cast %49 : vector<1x8x256xf32> to vector<8x256xf32>
    %c17_i32 = arith.constant 17 : i32
    %51 = tpu.dynamic_rotate %50 by %c17_i32 dim 1 : vector<8x256xf32>, i32 -> vector<8x256xf32>
    %cst = arith.constant 0.000000e+00 : f32
    %52 = vector.shape_cast %21 : vector<1x256xi1> to vector<1x256xi1>
    %53 = vector.broadcast %52 : vector<1x256xi1> to vector<8x256xi1>
    %54 = vector.broadcast %cst : f32 to vector<8x256xf32>
    %55 = arith.select %53, %51, %54 : vector<8x256xi1>, vector<8x256xf32>
    %c16_i32_23 = arith.constant 16 : i32
    %56 = tpu.dynamic_rotate %50 by %c16_i32_23 dim 1 : vector<8x256xf32>, i32 -> vector<8x256xf32>
    %cst_24 = arith.constant 0.000000e+00 : f32
    %57 = vector.shape_cast %23 : vector<1x256xi1> to vector<1x256xi1>
    %58 = vector.broadcast %57 : vector<1x256xi1> to vector<8x256xi1>
    %59 = vector.broadcast %cst_24 : f32 to vector<8x256xf32>
    %60 = arith.select %58, %56, %59 : vector<8x256xi1>, vector<8x256xf32>
    %c15_i32 = arith.constant 15 : i32
    %61 = tpu.dynamic_rotate %50 by %c15_i32 dim 1 : vector<8x256xf32>, i32 -> vector<8x256xf32>
    %cst_25 = arith.constant 0.000000e+00 : f32
    %62 = vector.shape_cast %28 : vector<1x256xi1> to vector<1x256xi1>
    %63 = vector.broadcast %62 : vector<1x256xi1> to vector<8x256xi1>
    %64 = vector.broadcast %cst_25 : f32 to vector<8x256xf32>
    %65 = arith.select %63, %61, %64 : vector<8x256xi1>, vector<8x256xf32>
    %c1_i32_26 = arith.constant 1 : i32
    %66 = tpu.dynamic_rotate %50 by %c1_i32_26 dim 1 : vector<8x256xf32>, i32 -> vector<8x256xf32>
    %cst_27 = arith.constant 0.000000e+00 : f32
    %67 = vector.shape_cast %30 : vector<1x256xi1> to vector<1x256xi1>
    %68 = vector.broadcast %67 : vector<1x256xi1> to vector<8x256xi1>
    %69 = vector.broadcast %cst_27 : f32 to vector<8x256xf32>
    %70 = arith.select %68, %66, %69 : vector<8x256xi1>, vector<8x256xf32>
    %c255_i32 = arith.constant 255 : i32
    %71 = tpu.dynamic_rotate %50 by %c255_i32 dim 1 : vector<8x256xf32>, i32 -> vector<8x256xf32>
    %cst_28 = arith.constant 0.000000e+00 : f32
    %72 = vector.shape_cast %32 : vector<1x256xi1> to vector<1x256xi1>
    %73 = vector.broadcast %72 : vector<1x256xi1> to vector<8x256xi1>
    %74 = vector.broadcast %cst_28 : f32 to vector<8x256xf32>
    %75 = arith.select %73, %71, %74 : vector<8x256xi1>, vector<8x256xf32>
    %c241_i32 = arith.constant 241 : i32
    %76 = tpu.dynamic_rotate %50 by %c241_i32 dim 1 : vector<8x256xf32>, i32 -> vector<8x256xf32>
    %cst_29 = arith.constant 0.000000e+00 : f32
    %77 = vector.shape_cast %37 : vector<1x256xi1> to vector<1x256xi1>
    %78 = vector.broadcast %77 : vector<1x256xi1> to vector<8x256xi1>
    %79 = vector.broadcast %cst_29 : f32 to vector<8x256xf32>
    %80 = arith.select %78, %76, %79 : vector<8x256xi1>, vector<8x256xf32>
    %c240_i32_30 = arith.constant 240 : i32
    %81 = tpu.dynamic_rotate %50 by %c240_i32_30 dim 1 : vector<8x256xf32>, i32 -> vector<8x256xf32>
    %cst_31 = arith.constant 0.000000e+00 : f32
    %82 = vector.shape_cast %39 : vector<1x256xi1> to vector<1x256xi1>
    %83 = vector.broadcast %82 : vector<1x256xi1> to vector<8x256xi1>
    %84 = vector.broadcast %cst_31 : f32 to vector<8x256xf32>
    %85 = arith.select %83, %81, %84 : vector<8x256xi1>, vector<8x256xf32>
    %c239_i32 = arith.constant 239 : i32
    %86 = tpu.dynamic_rotate %50 by %c239_i32 dim 1 : vector<8x256xf32>, i32 -> vector<8x256xf32>
    %cst_32 = arith.constant 0.000000e+00 : f32
    %87 = vector.shape_cast %44 : vector<1x256xi1> to vector<1x256xi1>
    %88 = vector.broadcast %87 : vector<1x256xi1> to vector<8x256xi1>
    %89 = vector.broadcast %cst_32 : f32 to vector<8x256xf32>
    %90 = arith.select %88, %86, %89 : vector<8x256xi1>, vector<8x256xf32>
    %91 = tpu.concatenate %55, %60, %65, %70, %50, %75, %80, %85, %90 in 0 : vector<8x256xf32>, vector<8x256xf32>, vector<8x256xf32>, vector<8x256xf32>, vector<8x256xf32>, vector<8x256xf32>, vector<8x256xf32>, vector<8x256xf32>, vector<8x256xf32> -> vector<72x256xf32>
    %cst_33 = arith.constant dense<0.000000e+00> : vector<32x256xf32>
    %92 = tpu.matmul %45, %91, %cst_33 {dimension_numbers = #tpu.dot_dimension_numbers<[1], [0], [0], [1], [0, 0, 1, 1], [], []>} : vector<32x72xf32>, vector<72x256xf32>, vector<32x256xf32> -> vector<32x256xf32>
    %93 = vector.broadcast %46 : vector<32x1xf32> to vector<32x256xf32>
    %94 = arith.addf %92, %93 : vector<32x256xf32>
    %cst_34 = arith.constant 0.000000e+00 : f32
    %95 = vector.broadcast %cst_34 : f32 to vector<32x256xf32>
    %96 = arith.maximumf %94, %95 : vector<32x256xf32>
    %cst_35 = arith.constant dense<0.000000e+00> : vector<18x256xf32>
    %97 = tpu.matmul %47, %96, %cst_35 {dimension_numbers = #tpu.dot_dimension_numbers<[1], [0], [0], [1], [0, 0, 1, 1], [], []>} : vector<18x32xf32>, vector<32x256xf32>, vector<18x256xf32> -> vector<18x256xf32>
    %98 = vector.extract_strided_slice %97 {offsets = [0, 0], sizes = [2, 256], strides = [1, 1]} : vector<18x256xf32> to vector<2x256xf32>
    %c17_i32_36 = arith.constant 17 : i32
    %99 = tpu.dynamic_rotate %98 by %c17_i32_36 dim 1 : vector<2x256xf32>, i32 -> vector<2x256xf32>
    %cst_37 = arith.constant 0.000000e+00 : f32
    %100 = vector.shape_cast %21 : vector<1x256xi1> to vector<1x256xi1>
    %101 = vector.broadcast %100 : vector<1x256xi1> to vector<2x256xi1>
    %102 = vector.broadcast %cst_37 : f32 to vector<2x256xf32>
    %103 = arith.select %101, %99, %102 : vector<2x256xi1>, vector<2x256xf32>
    %104 = vector.extract_strided_slice %97 {offsets = [2, 0], sizes = [2, 256], strides = [1, 1]} : vector<18x256xf32> to vector<2x256xf32>
    %c16_i32_38 = arith.constant 16 : i32
    %105 = tpu.dynamic_rotate %104 by %c16_i32_38 dim 1 : vector<2x256xf32>, i32 -> vector<2x256xf32>
    %cst_39 = arith.constant 0.000000e+00 : f32
    %106 = vector.shape_cast %23 : vector<1x256xi1> to vector<1x256xi1>
    %107 = vector.broadcast %106 : vector<1x256xi1> to vector<2x256xi1>
    %108 = vector.broadcast %cst_39 : f32 to vector<2x256xf32>
    %109 = arith.select %107, %105, %108 : vector<2x256xi1>, vector<2x256xf32>
    %110 = arith.addf %103, %109 : vector<2x256xf32>
    %111 = vector.extract_strided_slice %97 {offsets = [4, 0], sizes = [2, 256], strides = [1, 1]} : vector<18x256xf32> to vector<2x256xf32>
    %c15_i32_40 = arith.constant 15 : i32
    %112 = tpu.dynamic_rotate %111 by %c15_i32_40 dim 1 : vector<2x256xf32>, i32 -> vector<2x256xf32>
    %cst_41 = arith.constant 0.000000e+00 : f32
    %113 = vector.shape_cast %28 : vector<1x256xi1> to vector<1x256xi1>
    %114 = vector.broadcast %113 : vector<1x256xi1> to vector<2x256xi1>
    %115 = vector.broadcast %cst_41 : f32 to vector<2x256xf32>
    %116 = arith.select %114, %112, %115 : vector<2x256xi1>, vector<2x256xf32>
    %117 = arith.addf %110, %116 : vector<2x256xf32>
    %118 = vector.extract_strided_slice %97 {offsets = [6, 0], sizes = [2, 256], strides = [1, 1]} : vector<18x256xf32> to vector<2x256xf32>
    %c1_i32_42 = arith.constant 1 : i32
    %119 = tpu.dynamic_rotate %118 by %c1_i32_42 dim 1 : vector<2x256xf32>, i32 -> vector<2x256xf32>
    %cst_43 = arith.constant 0.000000e+00 : f32
    %120 = vector.shape_cast %30 : vector<1x256xi1> to vector<1x256xi1>
    %121 = vector.broadcast %120 : vector<1x256xi1> to vector<2x256xi1>
    %122 = vector.broadcast %cst_43 : f32 to vector<2x256xf32>
    %123 = arith.select %121, %119, %122 : vector<2x256xi1>, vector<2x256xf32>
    %124 = arith.addf %117, %123 : vector<2x256xf32>
    %125 = vector.extract_strided_slice %97 {offsets = [8, 0], sizes = [2, 256], strides = [1, 1]} : vector<18x256xf32> to vector<2x256xf32>
    %126 = arith.addf %124, %125 : vector<2x256xf32>
    %127 = vector.extract_strided_slice %97 {offsets = [10, 0], sizes = [2, 256], strides = [1, 1]} : vector<18x256xf32> to vector<2x256xf32>
    %c255_i32_44 = arith.constant 255 : i32
    %128 = tpu.dynamic_rotate %127 by %c255_i32_44 dim 1 : vector<2x256xf32>, i32 -> vector<2x256xf32>
    %cst_45 = arith.constant 0.000000e+00 : f32
    %129 = vector.shape_cast %32 : vector<1x256xi1> to vector<1x256xi1>
    %130 = vector.broadcast %129 : vector<1x256xi1> to vector<2x256xi1>
    %131 = vector.broadcast %cst_45 : f32 to vector<2x256xf32>
    %132 = arith.select %130, %128, %131 : vector<2x256xi1>, vector<2x256xf32>
    %133 = arith.addf %126, %132 : vector<2x256xf32>
    %134 = vector.extract_strided_slice %97 {offsets = [12, 0], sizes = [2, 256], strides = [1, 1]} : vector<18x256xf32> to vector<2x256xf32>
    %c241_i32_46 = arith.constant 241 : i32
    %135 = tpu.dynamic_rotate %134 by %c241_i32_46 dim 1 : vector<2x256xf32>, i32 -> vector<2x256xf32>
    %cst_47 = arith.constant 0.000000e+00 : f32
    %136 = vector.shape_cast %37 : vector<1x256xi1> to vector<1x256xi1>
    %137 = vector.broadcast %136 : vector<1x256xi1> to vector<2x256xi1>
    %138 = vector.broadcast %cst_47 : f32 to vector<2x256xf32>
    %139 = arith.select %137, %135, %138 : vector<2x256xi1>, vector<2x256xf32>
    %140 = arith.addf %133, %139 : vector<2x256xf32>
    %141 = vector.extract_strided_slice %97 {offsets = [14, 0], sizes = [2, 256], strides = [1, 1]} : vector<18x256xf32> to vector<2x256xf32>
    %c240_i32_48 = arith.constant 240 : i32
    %142 = tpu.dynamic_rotate %141 by %c240_i32_48 dim 1 : vector<2x256xf32>, i32 -> vector<2x256xf32>
    %cst_49 = arith.constant 0.000000e+00 : f32
    %143 = vector.shape_cast %39 : vector<1x256xi1> to vector<1x256xi1>
    %144 = vector.broadcast %143 : vector<1x256xi1> to vector<2x256xi1>
    %145 = vector.broadcast %cst_49 : f32 to vector<2x256xf32>
    %146 = arith.select %144, %142, %145 : vector<2x256xi1>, vector<2x256xf32>
    %147 = arith.addf %140, %146 : vector<2x256xf32>
    %148 = vector.extract_strided_slice %97 {offsets = [16, 0], sizes = [2, 256], strides = [1, 1]} : vector<18x256xf32> to vector<2x256xf32>
    %c239_i32_50 = arith.constant 239 : i32
    %149 = tpu.dynamic_rotate %148 by %c239_i32_50 dim 1 : vector<2x256xf32>, i32 -> vector<2x256xf32>
    %cst_51 = arith.constant 0.000000e+00 : f32
    %150 = vector.shape_cast %44 : vector<1x256xi1> to vector<1x256xi1>
    %151 = vector.broadcast %150 : vector<1x256xi1> to vector<2x256xi1>
    %152 = vector.broadcast %cst_51 : f32 to vector<2x256xf32>
    %153 = arith.select %151, %149, %152 : vector<2x256xi1>, vector<2x256xf32>
    %154 = arith.addf %147, %153 : vector<2x256xf32>
    %155 = vector.broadcast %48 : vector<2x1xf32> to vector<2x256xf32>
    %156 = arith.addf %154, %155 : vector<2x256xf32>
    %c0_52 = arith.constant 0 : index
    %c0_53 = arith.constant 0 : index
    %c0_54 = arith.constant 0 : index
    %157 = vector.load %arg6[%c0_52, %c0_53, %c0_54] : memref<1x2x256xf32, #tpu.memory_space<vmem>>, vector<1x2x256xf32>
    %158 = vector.shape_cast %157 : vector<1x2x256xf32> to vector<2x256xf32>
    %159 = vector.shape_cast %156 : vector<2x256xf32> to vector<1x2x256xf32>
    tpu.vector_store %arg6[%c0_52, %c0_53, %c0_54], %159 {strides = array<i32>} : memref<1x2x256xf32, #tpu.memory_space<vmem>>, vector<1x2x256xf32>,
    return
  }
  func.func @transform_0(%arg0: i32) -> (i32, i32, i32) {
    %c0_i32 = arith.constant 0 : i32
    %c0_i32_0 = arith.constant 0 : i32
    %c0_i32_1 = arith.constant 0 : i32
    return %arg0, %c0_i32, %c0_i32_0 : i32, i32, i32
  }
  func.func @transform_1(%arg0: i32) -> (i32, i32) {
    %c0_i32 = arith.constant 0 : i32
    %c0_i32_0 = arith.constant 0 : i32
    %c0_i32_1 = arith.constant 0 : i32
    return %c0_i32, %c0_i32_0 : i32, i32
  }
  func.func @transform_2(%arg0: i32) -> (i32, i32) {
    %c0_i32 = arith.constant 0 : i32
    %c0_i32_0 = arith.constant 0 : i32
    %c0_i32_1 = arith.constant 0 : i32
    return %c0_i32, %c0_i32_0 : i32, i32
  }
  func.func @transform_3(%arg0: i32) -> (i32, i32) {
    %c0_i32 = arith.constant 0 : i32
    %c0_i32_0 = arith.constant 0 : i32
    %c0_i32_1 = arith.constant 0 : i32
    return %c0_i32, %c0_i32_0 : i32, i32
  }
  func.func @transform_4(%arg0: i32) -> (i32, i32) {
    %c0_i32 = arith.constant 0 : i32
    %c0_i32_0 = arith.constant 0 : i32
    %c0_i32_1 = arith.constant 0 : i32
    return %c0_i32, %c0_i32_0 : i32, i32
  }
  func.func @transform_5(%arg0: i32) -> (i32, i32, i32) {
    %c0_i32 = arith.constant 0 : i32
    %c0_i32_0 = arith.constant 0 : i32
    %c0_i32_1 = arith.constant 0 : i32
    return %arg0, %c0_i32, %c0_i32_0 : i32, i32, i32
  }
}

</mosaic_0001>

<llo_original>
// kernel: tpu_custom_call.1
$region0: #{tpu_custom_call.1}
  #allocation0 [shape = 'u32[]', space=smem, size = 0x4, offset = 0x4, fixed_abs, tag = 'smem constant byte address 0x4 - core index']
  #allocation1 [shape = 'u32[144,128]{1,0:T(1,128)}', space=vmem, size = 0x12000, scoped, tag = 'internal scratch']
  %s0 = inlined_call_operand.vmem [shape: f32[2,8,256], index: 0, kind: input, shape index: {}]
  %s1 = inlined_call_operand.hbm [shape: f32[32,72], index: 1, kind: input, shape index: {}]
  %s2 = inlined_call_operand.vmem [shape: f32[32,1], index: 2, kind: input, shape index: {}]
  %s3 = inlined_call_operand.hbm [shape: f32[18,32], index: 3, kind: input, shape index: {}]
  %s4 = inlined_call_operand.vmem [shape: f32[2,1], index: 4, kind: input, shape index: {}]
  %s5 = inlined_call_operand.hbm [shape: f32[2,2,256], index: 5, kind: output, shape index: {}]
  %s6 = sld [smem:[#allocation0]]
  $region61: #{tpu_custom_call.1} parent=0
    _
  %s8 = ssub.s32 1, %s6
  %s9 = scalar_select 0, %s8, %s6
  $region1: #{tpu_custom_call.1} parent=0
    #allocation2 [shape = 'u8[16384]{0}', space=vmem, size = 0x4000, scoped, tag = 'input window, operand 1, single buffered']
    #allocation3 [shape = 's32[2]{0}', space=sflag, size = 0x8, scoped, tag = 'scoped memory for tpu_custom_call.1']
    #allocation4 [shape = 's32[2]{0}', space=sflag, size = 0x8, scoped, tag = 'scoped memory for tpu_custom_call.1']
    #allocation5 [shape = 'u8[12288]{0}', space=vmem, size = 0x3000, scoped, tag = 'input window, operand 3, single buffered']
    #allocation6 [shape = 's32[1]{0}', space=sflag, size = 0x4, scoped, tag = 'scoped memory for tpu_custom_call.1']
    #allocation7 [shape = 'u8[4096]{0}', space=vmem, size = 0x1000, scoped, tag = 'output window, operand 0']
    %10 = vsyncpa [#allocation3], 0
    %11 = vsyncpa [#allocation6], 0
    %12 = vsyncpa [#allocation4], 0
    %s13 = scalar_lea.sflag [#allocation4], 1
    %14 = vsyncpa %s13, 0
    loop: start=0, step=1, limit=4
    $region2: #{tpu_custom_call.1} parent=1 // loop_pre_header
      _
    $region3: #{tpu_custom_call.1} parent=1 // loop_header
      %s16 = sphi 0, %s20
      %p17 = scmp.ge.s32.totalorder %s16, 4
      %s26 = sphi 0, %s28
      %s29 = sphi 0, %s26
      %s30 = sphi 0, %s29
      %s46 = sphi 0, %s30
      %s50 = sphi 0, %s50
      %s52 = sphi 0, %s50
      %s53 = sphi 0, %s52
      %s67 = sphi 0, %s53
      %s71 = sphi 0, %s71
      %s73 = sphi 0, %s71
      %s74 = sphi 0, %s73
      %s88 = sphi 0, %s74
      %s92 = sphi 0, %s92
      %s94 = sphi 0, %s92
      %s95 = sphi 0, %s94
      %s109 = sphi 0, %s95
      %s113 = sphi 0, %s113
      %s115 = sphi 0, %s113
      %s116 = sphi 0, %s115
      %s130 = sphi 0, %s116
      %s136 = sphi 0, %s138
      %s139 = sphi 0, %s136
      %s140 = sphi 0, %s139
      %s156 = sphi 0, %s140
    $region4: #{tpu_custom_call.1} parent=1 // loop_header_branch
      %19 = sbr.rel (%p17) target = $region8
    $region5: #{tpu_custom_call.1} parent=1 // loop_body
      %s21 = ssub.s32 %s16, 1
      %s22 = ssub.s32 %s16, 2
      %s23 = sadd.s32 %s16, 1
      %s24 = ssub.s32 %s16, %s23
      %p25 = scmp.eq.s32.totalorder %s24, 0
      %s27 = sadd.s32 %s26, 1
      %s28 = scalar_select %p25, %s26, %s27
      %p31 = pneg %p25
      %p32 = scmp.eq.s32.totalorder %s16, 1
      %p33 = por %p31, %p32
      %p34 = scmp.ne.s32.totalorder %s26, %s29
      %p35 = scmp.eq.s32.totalorder %s16, 0
      %p36 = por %p34, %p35
      %p37 = scmp.ne.s32.totalorder %s26, %s29
      %p38 = scmp.eq.s32.totalorder %s21, 1
      %p39 = por %p37, %p38
      %p40 = scmp.ne.s32.totalorder %s29, %s30
      %p41 = scmp.eq.s32.totalorder %s21, 0
      %p42 = por %p40, %p41
      %p43 = scmp.ne.s32.totalorder %s29, %s30
      %p44 = scmp.eq.s32.totalorder %s22, 1
      %p45 = por %p43, %p44
      %p47 = scmp.ne.s32.totalorder %s30, %s46
      %p48 = scmp.eq.s32.totalorder %s22, 0
      %p49 = por %p47, %p48
      %s51 = sadd.s32 %s50, 1
      %p54 = scmp.eq.s32.totalorder %s16, 1
      %p55 = scmp.ne.s32.totalorder %s50, %s52
      %p56 = scmp.eq.s32.totalorder %s16, 0
      %p57 = por %p55, %p56
      %p58 = scmp.ne.s32.totalorder %s50, %s52
      %p59 = scmp.eq.s32.totalorder %s21, 1
      %p60 = por %p58, %p59
      %p61 = scmp.ne.s32.totalorder %s52, %s53
      %p62 = scmp.eq.s32.totalorder %s21, 0
      %p63 = por %p61, %p62
      %p64 = scmp.ne.s32.totalorder %s52, %s53
      %p65 = scmp.eq.s32.totalorder %s22, 1
      %p66 = por %p64, %p65
      %p68 = scmp.ne.s32.totalorder %s53, %s67
      %p69 = scmp.eq.s32.totalorder %s22, 0
      %p70 = por %p68, %p69
      %s72 = sadd.s32 %s71, 1
      %p75 = scmp.eq.s32.totalorder %s16, 1
      %p76 = scmp.ne.s32.totalorder %s71, %s73
      %p77 = scmp.eq.s32.totalorder %s16, 0
      %p78 = por %p76, %p77
      %p79 = scmp.ne.s32.totalorder %s71, %s73
      %p80 = scmp.eq.s32.totalorder %s21, 1
      %p81 = por %p79, %p80
      %p82 = scmp.ne.s32.totalorder %s73, %s74
      %p83 = scmp.eq.s32.totalorder %s21, 0
      %p84 = por %p82, %p83
      %p85 = scmp.ne.s32.totalorder %s73, %s74
      %p86 = scmp.eq.s32.totalorder %s22, 1
      %p87 = por %p85, %p86
      %p89 = scmp.ne.s32.totalorder %s74, %s88
      %p90 = scmp.eq.s32.totalorder %s22, 0
      %p91 = por %p89, %p90
      %s93 = sadd.s32 %s92, 1
      %p96 = scmp.eq.s32.totalorder %s16, 1
      %p97 = scmp.ne.s32.totalorder %s92, %s94
      %p98 = scmp.eq.s32.totalorder %s16, 0
      %p99 = por %p97, %p98
      %p100 = scmp.ne.s32.totalorder %s92, %s94
      %p101 = scmp.eq.s32.totalorder %s21, 1
      %p102 = por %p100, %p101
      %p103 = scmp.ne.s32.totalorder %s94, %s95
      %p104 = scmp.eq.s32.totalorder %s21, 0
      %p105 = por %p103, %p104
      %p106 = scmp.ne.s32.totalorder %s94, %s95
      %p107 = scmp.eq.s32.totalorder %s22, 1
      %p108 = por %p106, %p107
      %p110 = scmp.ne.s32.totalorder %s95, %s109
      %p111 = scmp.eq.s32.totalorder %s22, 0
      %p112 = por %p110, %p111
      %s114 = sadd.s32 %s113, 1
      %p117 = scmp.eq.s32.totalorder %s16, 1
      %p118 = scmp.ne.s32.totalorder %s113, %s115
      %p119 = scmp.eq.s32.totalorder %s16, 0
      %p120 = por %p118, %p119
      %p121 = scmp.ne.s32.totalorder %s113, %s115
      %p122 = scmp.eq.s32.totalorder %s21, 1
      %p123 = por %p121, %p122
      %p124 = scmp.ne.s32.totalorder %s115, %s116
      %p125 = scmp.eq.s32.totalorder %s21, 0
      %p126 = por %p124, %p125
      %p127 = scmp.ne.s32.totalorder %s115, %s116
      %p128 = scmp.eq.s32.totalorder %s22, 1
      %p129 = por %p127, %p128
      %p131 = scmp.ne.s32.totalorder %s116, %s130
      %p132 = scmp.eq.s32.totalorder %s22, 0
      %p133 = por %p131, %p132
      %s134 = ssub.s32 %s16, %s23
      %p135 = scmp.eq.s32.totalorder %s134, 0
      %s137 = sadd.s32 %s136, 1
      %s138 = scalar_select %p135, %s136, %s137
      %p141 = pneg %p135
      %p142 = scmp.eq.s32.totalorder %s16, 1
      %p143 = por %p141, %p142
      %p144 = scmp.ne.s32.totalorder %s136, %s139
      %p145 = scmp.eq.s32.totalorder %s16, 0
      %p146 = por %p144, %p145
      %p147 = scmp.ne.s32.totalorder %s136, %s139
      %p148 = scmp.eq.s32.totalorder %s21, 1
      %p149 = por %p147, %p148
      %p150 = scmp.ne.s32.totalorder %s139, %s140
      %p151 = scmp.eq.s32.totalorder %s21, 0
      %p152 = por %p150, %p151
      %p153 = scmp.ne.s32.totalorder %s139, %s140
      %p154 = scmp.eq.s32.totalorder %s22, 1
      %p155 = por %p153, %p154
      %p157 = scmp.ne.s32.totalorder %s140, %s156
      %p158 = scmp.eq.s32.totalorder %s22, 0
      %p159 = por %p157, %p158
      %p160 = scmp.le.s32.totalorder 1, %s16
      %p161 = scmp.lt.s32.totalorder %s16, 3
      %p162 = pnand %p160, %p161
      %p163 = pneg %p162
      // Predicated region
      $region9: #{tpu_custom_call.1} parent=5 // pred_check
        _
      $region10: #{tpu_custom_call.1} parent=5 // pred_check_branch
        %165 = sbr.rel (%p162) target = $region12
      $region11: #{tpu_custom_call.1} parent=5 // pred_region
        %s166 = ssub.s32 %s16, 1
        // Predicated region
        $region13: #{tpu_custom_call.1} parent=11 // pred_check
          %p167 = pneg %p63
        $region14: #{tpu_custom_call.1} parent=11 // pred_check_branch
          %169 = sbr.rel (%p167) target = $region16
        $region15: #{tpu_custom_call.1} parent=11 // pred_region
          %s171 = ssub.s32 512, 512
          %172 = vsyncadd [#allocation3], %s171
          %s173 = sshll.u32 [#allocation2], 4
          %s174 = int_to_ptr.vmem [resolvable:$true] %s173
          %179 = dma.hbm_to_vmem [thread:$0]  %s1, 512, %s174, [#allocation3], 128, 128, 8
        $region16: #{tpu_custom_call.1} parent=11 // pred_fallthru
          _
        // Predicated region
        $region17: #{tpu_custom_call.1} parent=11 // pred_check
          %p180 = pneg %p84
        $region18: #{tpu_custom_call.1} parent=11 // pred_check_branch
          %182 = sbr.rel (%p180) target = $region20
        $region19: #{tpu_custom_call.1} parent=11 // pred_region
          _
        $region20: #{tpu_custom_call.1} parent=11 // pred_fallthru
          _
        // Predicated region
        $region21: #{tpu_custom_call.1} parent=11 // pred_check
          %p183 = pneg %p105
        $region22: #{tpu_custom_call.1} parent=11 // pred_check_branch
          %185 = sbr.rel (%p183) target = $region24
        $region23: #{tpu_custom_call.1} parent=11 // pred_region
          %s187 = ssub.s32 384, 384
          %188 = vsyncadd [#allocation6], %s187
          %s189 = sshll.u32 [#allocation5], 4
          %s190 = int_to_ptr.vmem [resolvable:$true] %s189
          %195 = dma.hbm_to_vmem [thread:$0]  %s3, 384, %s190, [#allocation6], 128, 128, 8
        $region24: #{tpu_custom_call.1} parent=11 // pred_fallthru
          _
        // Predicated region
        $region25: #{tpu_custom_call.1} parent=11 // pred_check
          %p196 = pneg %p126
        $region26: #{tpu_custom_call.1} parent=11 // pred_check_branch
          %198 = sbr.rel (%p196) target = $region28
        $region27: #{tpu_custom_call.1} parent=11 // pred_region
          _
        $region28: #{tpu_custom_call.1} parent=11 // pred_fallthru
          _
      $region12: #{tpu_custom_call.1} parent=5 // pred_fallthru
        _
      %p199 = scmp.lt.s32.totalorder %s16, 2
      // Predicated region
      $region29: #{tpu_custom_call.1} parent=5 // pred_check
        %p200 = pneg %p199
      $region30: #{tpu_custom_call.1} parent=5 // pred_check_branch
        %202 = sbr.rel (%p200) target = $region32
      $region31: #{tpu_custom_call.1} parent=5 // pred_region
        // Predicated region
        $region33: #{tpu_custom_call.1} parent=31 // pred_check
          %p203 = pneg %p36
        $region34: #{tpu_custom_call.1} parent=31 // pred_check_branch
          %205 = sbr.rel (%p203) target = $region36
        $region35: #{tpu_custom_call.1} parent=31 // pred_region
          %p206 = scmp.lt.s32.totalorder %s16, 1
          %s207 = scalar_select %p206, %s16, 1
          %s208 = smul.addr %s207, 2
          %s209 = smul.addr %s208, 8
          %s210 = scalar_lea.vmem %s0, %s209
        $region36: #{tpu_custom_call.1} parent=31 // pred_fallthru
          _
      $region32: #{tpu_custom_call.1} parent=5 // pred_fallthru
        _
      %p211 = scmp.le.s32.totalorder 1, %s16
      %p212 = scmp.lt.s32.totalorder %s16, 3
      %p213 = pnand %p211, %p212
      %p214 = pneg %p213
      // Predicated region
      $region37: #{tpu_custom_call.1} parent=5 // pred_check
        _
      $region38: #{tpu_custom_call.1} parent=5 // pred_check_branch
        %216 = sbr.rel (%p213) target = $region40
      $region39: #{tpu_custom_call.1} parent=5 // pred_region
        %s217 = ssub.s32 %s16, 1
        // Predicated region
        $region41: #{tpu_custom_call.1} parent=39 // pred_check
          %p218 = pneg %p63
        $region42: #{tpu_custom_call.1} parent=39 // pred_check_branch
          %220 = sbr.rel (%p218) target = $region44
        $region43: #{tpu_custom_call.1} parent=39 // pred_region
          %221 = dma.done [#allocation3], 512
        $region44: #{tpu_custom_call.1} parent=39 // pred_fallthru
          _
        // Predicated region
        $region45: #{tpu_custom_call.1} parent=39 // pred_check
          %p222 = pneg %p105
        $region46: #{tpu_custom_call.1} parent=39 // pred_check_branch
          %224 = sbr.rel (%p222) target = $region48
        $region47: #{tpu_custom_call.1} parent=39 // pred_region
          %225 = dma.done [#allocation6], 384
        $region48: #{tpu_custom_call.1} parent=39 // pred_fallthru
          _
        %p226 = scmp.lt.s32.totalorder %s21, 1
        %s227 = scalar_select %p226, %s21, 1
        %s228 = smul.addr %s227, 2
        %s229 = smul.addr %s228, 8
        %s230 = scalar_lea.vmem %s0, %s229
        %p231 = pneg %p42
        %p232 = pneg %p39
        %p233 = pneg %p63
        %p234 = pneg %p60
        %p235 = pneg %p84
        %p236 = pneg %p81
        %p237 = pneg %p105
        %p238 = pneg %p102
        %p239 = pneg %p126
        %p240 = pneg %p123
        %p241 = pneg %p152
        %p242 = pneg %p149
        %s243 = sand.u32 %s139, 1
        %s244 = scalar_lea.sflag [#allocation4], %s243
        %s245 = sand.u32 %s139, 1
        %s246 = smul.addr %s245, 4
        %s247 = scalar_lea.vmem [#allocation7], %s246
        %p248 = scmp.lt.s32.totalorder %s21, 1
        %s249 = scalar_select %p248, %s21, 1
        %s250 = smul.addr %s249, 2
        %s251 = smul.addr %s250, 8
        %s252 = scalar_lea.vmem %s0, %s251
        %v253 = vlaneseq
        %v254 = vand.u32 %v253, 127
        %v255 = vadd.s32 %v254, 128
        %vm256 = vcmp.lt.s32.totalorder %v254, 0
        %v257 = vsub.s32 0, %v254
        %v258 = vsel %vm256, %v257, %v254
        %v259 = vshrl.u32 %v258, 4
        %v260 = vand.u32 %v258, 15
        %v261 = vsub.s32 0, %v260
        %v262 = vsel %vm256, %v261, %v260
        %vm263 = vcmp.lt.s32.totalorder %v255, 0
        %v264 = vsub.s32 0, %v255
        %v265 = vsel %vm263, %v264, %v255
        %v266 = vshrl.u32 %v265, 4
        %v267 = vand.u32 %v265, 15
        %v268 = vsub.s32 0, %v267
        %v269 = vsel %vm263, %v268, %v267
        %vm270 = vcmp.ne.s32.totalorder %v262, 0
        %vm271 = vcmp.ne.s32.totalorder %v269, 0
        %vm272 = vcmp.lt.s32.totalorder %v262, 0
        %vm273 = vcmp.lt.s32.totalorder %v269, 0
        %vm274 = vmand %vm272, %vm270
        %vm275 = vmand %vm273, %vm271
        %v276 = vadd.s32 %v262, 16
        %v277 = vadd.s32 %v269, 16
        %v278 = vsel %vm274, %v276, %v262
        %v279 = vsel %vm275, %v277, %v269
        %vm280 = vcmp.ge.s32.totalorder %v254, 16
        %vm281 = vcmp.ge.s32.totalorder %v255, 16
        %vm282 = vcmp.ge.s32.totalorder %v278, 1
        %vm283 = vcmp.ge.s32.totalorder %v279, 1
        %vm284 = vmand %vm280, %vm282
        %vm285 = vmand %vm281, %vm283
        %vm286 = vcmp.le.s32.totalorder %v278, 14
        %vm287 = vcmp.le.s32.totalorder %v279, 14
        %vm288 = vmand %vm280, %vm286
        %vm289 = vmand %vm281, %vm287
        %vm290 = vcmp.lt.s32.totalorder %v254, 240
        %vm291 = vcmp.lt.s32.totalorder %v255, 240
        %vm292 = vmand %vm290, %vm282
        %vm293 = vmand %vm291, %vm283
        %vm294 = vmand %vm290, %vm286
        %vm295 = vmand %vm291, %vm287
        %v296 = vld [vmem:[#allocation2] sm:$0xff]
        %v297 = vld [vmem:[#allocation2 + $0x8] sm:$0xff]
        %v298 = vld [vmem:[#allocation2 + $0x10] sm:$0xff]
        %v299 = vld [vmem:[#allocation2 + $0x18] sm:$0xff]
        %v300 = vld [vmem:[%s2] sm:$0xff]
        %v301 = vld [vmem:[%s2 + $0x8] sm:$0xff]
        %v302 = vld [vmem:[%s2 + $0x10] sm:$0xff]
        %v303 = vld [vmem:[%s2 + $0x18] sm:$0xff]
        %v304 = vld [vmem:[#allocation5] sm:$0xff]
        %v305 = vld [vmem:[#allocation5 + $0x8] sm:$0xff]
        %v306 = vld [vmem:[#allocation5 + $0x10] sm:$0x3]
        %v307 = vld [vmem:[%s4] sm:$0x3]
        %v308 = vld [vmem:[%s252] sm:$0xff]
        %v309 = vld [vmem:[%s252 + $0x8] sm:$0xff]
        %310 = vrot.lane.b32.xlu0 %v308, 17
        %v311 = vpop.permute.xlu0 %310
        %312 = vrot.lane.b32.xlu0 %v309, 17
        %v313 = vpop.permute.xlu0 %312
        %vm314 = vcmp.lt.s32.totalorder %v254, 17
        %v315 = vsel %vm314, %v311, %v313
        %v316 = vsel %vm314, %v313, %v311
        %v317 = vsel %vm284, 1, 0
        %v318 = vsel %vm285, 1, 0
        %vm319 = vcmp.eq.s32.totalorder %v317, 1
        %vm320 = vcmp.eq.s32.totalorder %v318, 1
        %v321 = vsel %vm319, %v316, 0.0
        %v322 = vsel %vm320, %v315, 0.0
        %323 = vrot.lane.b32.xlu0 %v308, 16
        %v324 = vpop.permute.xlu0 %323
        %325 = vrot.lane.b32.xlu0 %v309, 16
        %v326 = vpop.permute.xlu0 %325
        %vm327 = vcmp.lt.s32.totalorder %v254, 16
        %v328 = vsel %vm327, %v324, %v326
        %v329 = vsel %vm327, %v326, %v324
        %v330 = vsel %vm280, 1, 0
        %v331 = vsel %vm281, 1, 0
        %vm332 = vcmp.eq.s32.totalorder %v330, 1
        %vm333 = vcmp.eq.s32.totalorder %v331, 1
        %v334 = vsel %vm332, %v329, 0.0
        %v335 = vsel %vm333, %v328, 0.0
        %336 = vrot.lane.b32.xlu0 %v308, 15
        %v337 = vpop.permute.xlu0 %336
        %338 = vrot.lane.b32.xlu0 %v309, 15
        %v339 = vpop.permute.xlu0 %338
        %vm340 = vcmp.lt.s32.totalorder %v254, 15
        %v341 = vsel %vm340, %v337, %v339
        %v342 = vsel %vm340, %v339, %v337
        %v343 = vsel %vm288, 1, 0
        %v344 = vsel %vm289, 1, 0
        %vm345 = vcmp.eq.s32.totalorder %v343, 1
        %vm346 = vcmp.eq.s32.totalorder %v344, 1
        %v347 = vsel %vm345, %v342, 0.0
        %v348 = vsel %vm346, %v341, 0.0
        %349 = vrot.lane.b32.xlu0 %v308, 1
        %v350 = vpop.permute.xlu0 %349
        %351 = vrot.lane.b32.xlu0 %v309, 1
        %v352 = vpop.permute.xlu0 %351
        %vm353 = vcmp.lt.s32.totalorder %v254, 1
        %v354 = vsel %vm353, %v350, %v352
        %v355 = vsel %vm353, %v352, %v350
        %v356 = vsel %vm282, 1, 0
        %v357 = vsel %vm283, 1, 0
        %vm358 = vcmp.eq.s32.totalorder %v356, 1
        %vm359 = vcmp.eq.s32.totalorder %v357, 1
        %v360 = vsel %vm358, %v355, 0.0
        %v361 = vsel %vm359, %v354, 0.0
        %362 = vrot.lane.b32.xlu0 %v308, 127
        %v363 = vpop.permute.xlu0 %362
        %364 = vrot.lane.b32.xlu0 %v309, 127
        %v365 = vpop.permute.xlu0 %364
        %vm366 = vcmp.lt.s32.totalorder %v254, 127
        %v367 = vsel %vm366, %v363, %v365
        %v368 = vsel %vm366, %v365, %v363
        %v369 = vsel %vm286, 1, 0
        %v370 = vsel %vm287, 1, 0
        %vm371 = vcmp.eq.s32.totalorder %v369, 1
        %vm372 = vcmp.eq.s32.totalorder %v370, 1
        %v373 = vsel %vm371, %v367, 0.0
        %v374 = vsel %vm372, %v368, 0.0
        %375 = vrot.lane.b32.xlu0 %v308, 113
        %v376 = vpop.permute.xlu0 %375
        %377 = vrot.lane.b32.xlu0 %v309, 113
        %v378 = vpop.permute.xlu0 %377
        %vm379 = vcmp.lt.s32.totalorder %v254, 113
        %v380 = vsel %vm379, %v376, %v378
        %v381 = vsel %vm379, %v378, %v376
        %v382 = vsel %vm292, 1, 0
        %v383 = vsel %vm293, 1, 0
        %vm384 = vcmp.eq.s32.totalorder %v382, 1
        %vm385 = vcmp.eq.s32.totalorder %v383, 1
        %v386 = vsel %vm384, %v380, 0.0
        %v387 = vsel %vm385, %v381, 0.0
        %388 = vrot.lane.b32.xlu0 %v308, 112
        %v389 = vpop.permute.xlu0 %388
        %390 = vrot.lane.b32.xlu0 %v309, 112
        %v391 = vpop.permute.xlu0 %390
        %vm392 = vcmp.lt.s32.totalorder %v254, 112
        %v393 = vsel %vm392, %v389, %v391
        %v394 = vsel %vm392, %v391, %v389
        %v395 = vsel %vm290, 1, 0
        %v396 = vsel %vm291, 1, 0
        %vm397 = vcmp.eq.s32.totalorder %v395, 1
        %vm398 = vcmp.eq.s32.totalorder %v396, 1
        %v399 = vsel %vm397, %v393, 0.0
        %v400 = vsel %vm398, %v394, 0.0
        %401 = vrot.lane.b32.xlu0 %v308, 111
        %v402 = vpop.permute.xlu0 %401
        %403 = vrot.lane.b32.xlu0 %v309, 111
        %v404 = vpop.permute.xlu0 %403
        %vm405 = vcmp.lt.s32.totalorder %v254, 111
        %v406 = vsel %vm405, %v402, %v404
        %v407 = vsel %vm405, %v404, %v402
        %v408 = vsel %vm294, 1, 0
        %v409 = vsel %vm295, 1, 0
        %vm410 = vcmp.eq.s32.totalorder %v408, 1
        %vm411 = vcmp.eq.s32.totalorder %v409, 1
        %v412 = vsel %vm410, %v406, 0.0
        %v413 = vsel %vm411, %v407, 0.0
        %415 = vset.pattern.permute.xlu0 0
        %416 = vperm.xlu0 %415, %v300
        %v417 = vpop.permute.xlu0 %416
        %420 = vset.pattern.permute.xlu0 0
        %421 = vperm.xlu0 %420, %v301
        %v422 = vpop.permute.xlu0 %421
        %425 = vset.pattern.permute.xlu0 0
        %426 = vperm.xlu0 %425, %v302
        %v427 = vpop.permute.xlu0 %426
        %430 = vset.pattern.permute.xlu0 0
        %431 = vperm.xlu0 %430, %v303
        %v432 = vpop.permute.xlu0 %431
        %vm434 = vcmask 588800
        %v436 = vsel %vm434, %v296, 0
        %v439 = vsel %vm434, %v297, 0
        %v442 = vsel %vm434, %v298, 0
        %v445 = vsel %vm434, %v299, 0
        %447 = vmatprep.subr.mxu0 %v322
        %448 = vmatpush1.msra.mxu0 %v321
        %449 = vmatprep.subr.mxu0 %v335
        %450 = vmatpush1.msra.mxu0 %v334
        %451 = vmatprep.subr.mxu0 %v348
        %452 = vmatpush1.msra.mxu0 %v347
        %453 = vmatprep.subr.mxu0 %v361
        %454 = vmatpush1.msra.mxu0 %v360
        %455 = vmatprep.subr.mxu0 %v309
        %456 = vmatpush1.msra.mxu0 %v308
        %457 = vmatprep.subr.mxu0 %v374
        %458 = vmatpush1.msra.mxu0 %v373
        %459 = vmatprep.subr.mxu0 %v387
        %460 = vmatpush1.msra.mxu0 %v386
        %461 = vmatprep.subr.mxu0 %v400
        %462 = vmatpush1.msra.mxu0 %v399
        %463 = vmatprep.subr.mxu0 %v413
        %464 = vmatpush1.msra.mxu0 %v412
        %465 = vmatprep.subr.mxu0 0.0
        %466 = vmatpush1.msra.mxu0 0.0
        %467 = vmatprep.subr.mxu0 0.0
        %468 = vmatpush1.msra.mxu0 0.0
        %469 = vmatprep.subr.mxu0 0.0
        %470 = vmatpush1.msra.mxu0 0.0
        %471 = vmatprep.subr.mxu0 0.0
        %472 = vmatpush1.msra.mxu0 0.0
        %473 = vmatprep.subr.mxu0 0.0
        %474 = vmatpush1.msra.mxu0 0.0
        %475 = vmatprep.subr.mxu0 0.0
        %476 = vmatpush1.msra.mxu0 0.0
        %477 = vmatprep.subr.mxu0 0.0
        %478 = vmatpush1.msra.mxu0 0.0
        %479 = vmatprep.subr.mxu0 0.0
        %480 = vmatpush1.msra.mxu0 0.0
        %481 = vmatprep.subr.mxu0 0.0
        %482 = vmatpush1.msra.mxu0 0.0
        %483 = vmatprep.subr.mxu0 0.0
        %484 = vmatpush1.msra.mxu0 0.0
        %485 = vmatprep.subr.mxu0 0.0
        %486 = vmatpush1.msra.mxu0 0.0
        %487 = vmatprep.subr.mxu0 0.0
        %488 = vmatpush1.msra.mxu0 0.0
        %489 = vmatprep.subr.mxu0 0.0
        %490 = vmatpush1.msra.mxu0 0.0
        %491 = vmatprep.subr.mxu0 0.0
        %492 = vmatpush1.msra.mxu0 0.0
        %493 = vmatprep.subr.mxu0 0.0
        %494 = vmatpush1.msra.mxu0 0.0
        %495 = vmatprep.subr.mxu0 0.0
        %496 = vmatpush1.msra.mxu0 0.0
        %497 = vmatprep.subr.mxu0 0.0
        %498 = vmatpush1.msra.mxu0 0.0
        %499 = vmatprep.subr.mxu0 0.0
        %500 = vmatpush1.msra.mxu0 0.0
        %501 = vmatprep.subr.mxu0 0.0
        %502 = vmatpush1.msra.mxu0 0.0
        %503 = vmatprep.subr.mxu0 0.0
        %504 = vmatpush1.msra.mxu0 0.0
        %505 = vmatprep.subr.mxu0 0.0
        %506 = vmatpush1.msra.mxu0 0.0
        %507 = vmatprep.subr.mxu0 0.0
        %508 = vmatpush1.msra.mxu0 0.0
        %509 = vmatprep.subr.mxu0 0.0
        %510 = vmatpush1.msra.mxu0 0.0
        %511 = vmatprep.mubr.f32.mxu0 0.0
        %512 = vmatmul.mubr.f32.gmra.mrb[0].mxu0 %v436
        %v513 = vpop.f32.mrb[0].mxu0
        %v514 = vadd.f32 %v417, %v513
        %v515 = vpop.f32.mrb[0].mxu0
        %v516 = vadd.f32 %v417, %v515
        %517 = vmatprep.mubr.f32.mxu0 0.0
        %518 = vmatmul.mubr.f32.gmra.mrb[0].mxu0 %v439
        %v519 = vpop.f32.mrb[0].mxu0
        %v520 = vadd.f32 %v422, %v519
        %v521 = vpop.f32.mrb[0].mxu0
        %v522 = vadd.f32 %v422, %v521
        %523 = vmatprep.mubr.f32.mxu0 0.0
        %524 = vmatmul.mubr.f32.gmra.mrb[0].mxu0 %v442
        %v525 = vpop.f32.mrb[0].mxu0
        %v526 = vadd.f32 %v427, %v525
        %v527 = vpop.f32.mrb[0].mxu0
        %v528 = vadd.f32 %v427, %v527
        %529 = vmatprep.mubr.f32.mxu0 0.0
        %530 = vmatmul.mubr.f32.gmra.mrb[0].mxu0 %v445
        %v531 = vpop.f32.mrb[0].mxu0
        %v532 = vadd.f32 %v432, %v531
        %v533 = vpop.f32.mrb[0].mxu0
        %v534 = vadd.f32 %v432, %v533
        %535 = vdwg.mxu0
        %v536 = vmax.f32 %v514, 0.0
        %v537 = vmax.f32 %v516, 0.0
        %v538 = vmax.f32 %v520, 0.0
        %v539 = vmax.f32 %v522, 0.0
        %v540 = vmax.f32 %v526, 0.0
        %v541 = vmax.f32 %v528, 0.0
        %v542 = vmax.f32 %v532, 0.0
        %v543 = vmax.f32 %v534, 0.0
        %vm544 = vcmask 261120
        %v546 = vsel %vm544, %v304, 0
        %v549 = vsel %vm544, %v305, 0
        %v552 = vsel %vm544, %v306, 0
        %554 = vmatprep.subr.mxu0 %v537
        %555 = vmatpush1.msra.mxu0 %v536
        %556 = vmatprep.subr.mxu0 %v539
        %557 = vmatpush1.msra.mxu0 %v538
        %558 = vmatprep.subr.mxu0 %v541
        %559 = vmatpush1.msra.mxu0 %v540
        %560 = vmatprep.subr.mxu0 %v543
        %561 = vmatpush1.msra.mxu0 %v542
        %562 = vmatprep.subr.mxu0 0.0
        %563 = vmatpush1.msra.mxu0 0.0
        %564 = vmatprep.subr.mxu0 0.0
        %565 = vmatpush1.msra.mxu0 0.0
        %566 = vmatprep.subr.mxu0 0.0
        %567 = vmatpush1.msra.mxu0 0.0
        %568 = vmatprep.subr.mxu0 0.0
        %569 = vmatpush1.msra.mxu0 0.0
        %570 = vmatprep.subr.mxu0 0.0
        %571 = vmatpush1.msra.mxu0 0.0
        %572 = vmatprep.subr.mxu0 0.0
        %573 = vmatpush1.msra.mxu0 0.0
        %574 = vmatprep.subr.mxu0 0.0
        %575 = vmatpush1.msra.mxu0 0.0
        %576 = vmatprep.subr.mxu0 0.0
        %577 = vmatpush1.msra.mxu0 0.0
        %578 = vmatprep.subr.mxu0 0.0
        %579 = vmatpush1.msra.mxu0 0.0
        %580 = vmatprep.subr.mxu0 0.0
        %581 = vmatpush1.msra.mxu0 0.0
        %582 = vmatprep.subr.mxu0 0.0
        %583 = vmatpush1.msra.mxu0 0.0
        %584 = vmatprep.subr.mxu0 0.0
        %585 = vmatpush1.msra.mxu0 0.0
        %586 = vmatprep.subr.mxu0 0.0
        %587 = vmatpush1.msra.mxu0 0.0
        %588 = vmatprep.subr.mxu0 0.0
        %589 = vmatpush1.msra.mxu0 0.0
        %590 = vmatprep.subr.mxu0 0.0
        %591 = vmatpush1.msra.mxu0 0.0
        %592 = vmatprep.subr.mxu0 0.0
        %593 = vmatpush1.msra.mxu0 0.0
        %594 = vmatprep.subr.mxu0 0.0
        %595 = vmatpush1.msra.mxu0 0.0
        %596 = vmatprep.subr.mxu0 0.0
        %597 = vmatpush1.msra.mxu0 0.0
        %598 = vmatprep.subr.mxu0 0.0
        %599 = vmatpush1.msra.mxu0 0.0
        %600 = vmatprep.subr.mxu0 0.0
        %601 = vmatpush1.msra.mxu0 0.0
        %602 = vmatprep.subr.mxu0 0.0
        %603 = vmatpush1.msra.mxu0 0.0
        %604 = vmatprep.subr.mxu0 0.0
        %605 = vmatpush1.msra.mxu0 0.0
        %606 = vmatprep.subr.mxu0 0.0
        %607 = vmatpush1.msra.mxu0 0.0
        %608 = vmatprep.subr.mxu0 0.0
        %609 = vmatpush1.msra.mxu0 0.0
        %610 = vmatprep.subr.mxu0 0.0
        %611 = vmatpush1.msra.mxu0 0.0
        %612 = vmatprep.subr.mxu0 0.0
        %613 = vmatpush1.msra.mxu0 0.0
        %614 = vmatprep.subr.mxu0 0.0
        %615 = vmatpush1.msra.mxu0 0.0
        %616 = vmatprep.subr.mxu0 0.0
        %617 = vmatpush1.msra.mxu0 0.0
        %618 = vmatprep.mubr.f32.mxu0 0.0
        %619 = vmatmul.mubr.f32.gmra.mrb[0].mxu0 %v546
        %v620 = vpop.f32.mrb[0].mxu0
        %v621 = vadd.f32 0.0, %v620
        %v622 = vpop.f32.mrb[0].mxu0
        %v623 = vadd.f32 0.0, %v622
        %624 = vmatprep.mubr.f32.mxu0 0.0
        %625 = vmatmul.mubr.f32.gmra.mrb[0].mxu0 %v549
        %v626 = vpop.f32.mrb[0].mxu0
        %v627 = vadd.f32 0.0, %v626
        %v628 = vpop.f32.mrb[0].mxu0
        %v629 = vadd.f32 0.0, %v628
        %630 = vmatprep.mubr.f32.mxu0 0.0
        %631 = vmatmul.mubr.f32.gmra.mrb[0].mxu0 %v552
        %v632 = vpop.f32.mrb[0].mxu0
        %v633 = vadd.f32 0.0, %v632
        %v634 = vpop.f32.mrb[0].mxu0
        %v635 = vadd.f32 0.0, %v634
        %636 = vdwg.mxu0
        %637 = vrot.lane.b32.xlu0 %v621, 17
        %v638 = vpop.permute.xlu0 %637
        %639 = vrot.lane.b32.xlu0 %v623, 17
        %v640 = vpop.permute.xlu0 %639
        %v641 = vsel %vm314, %v638, %v640
        %v642 = vsel %vm314, %v640, %v638
        %v643 = vsel %vm319, %v642, 0.0
        %v644 = vsel %vm320, %v641, 0.0
        %v647 = vrot.slane %v621, 2
        %v648 = vrot.slane %v623, 2
        %651 = vrot.lane.b32.xlu0 %v647, 16
        %v652 = vpop.permute.xlu0 %651
        %653 = vrot.lane.b32.xlu0 %v648, 16
        %v654 = vpop.permute.xlu0 %653
        %v655 = vsel %vm327, %v652, %v654
        %v656 = vsel %vm327, %v654, %v652
        %v657 = vsel %vm332, %v656, 0.0
        %v658 = vsel %vm333, %v655, 0.0
        %v659 = vadd.f32 %v643, %v657
        %v660 = vadd.f32 %v644, %v658
        %v661 = vrot.slane %v621, 4
        %v662 = vrot.slane %v623, 4
        %665 = vrot.lane.b32.xlu0 %v661, 15
        %v666 = vpop.permute.xlu0 %665
        %667 = vrot.lane.b32.xlu0 %v662, 15
        %v668 = vpop.permute.xlu0 %667
        %v669 = vsel %vm340, %v666, %v668
        %v670 = vsel %vm340, %v668, %v666
        %v671 = vsel %vm345, %v670, 0.0
        %v672 = vsel %vm346, %v669, 0.0
        %v673 = vadd.f32 %v659, %v671
        %v674 = vadd.f32 %v660, %v672
        %v675 = vrot.slane %v621, 6
        %v676 = vrot.slane %v623, 6
        %679 = vrot.lane.b32.xlu0 %v675, 1
        %v680 = vpop.permute.xlu0 %679
        %681 = vrot.lane.b32.xlu0 %v676, 1
        %v682 = vpop.permute.xlu0 %681
        %v683 = vsel %vm353, %v680, %v682
        %v684 = vsel %vm353, %v682, %v680
        %v685 = vsel %vm358, %v684, 0.0
        %v686 = vsel %vm359, %v683, 0.0
        %v687 = vadd.f32 %v673, %v685
        %v688 = vadd.f32 %v674, %v686
        %v689 = vadd.f32 %v687, %v627
        %v690 = vadd.f32 %v688, %v629
        %v693 = vrot.slane %v627, 2
        %v694 = vrot.slane %v629, 2
        %697 = vrot.lane.b32.xlu0 %v693, 127
        %v698 = vpop.permute.xlu0 %697
        %699 = vrot.lane.b32.xlu0 %v694, 127
        %v700 = vpop.permute.xlu0 %699
        %v701 = vsel %vm366, %v698, %v700
        %v702 = vsel %vm366, %v700, %v698
        %v703 = vsel %vm371, %v701, 0.0
        %v704 = vsel %vm372, %v702, 0.0
        %v705 = vadd.f32 %v689, %v703
        %v706 = vadd.f32 %v690, %v704
        %v707 = vrot.slane %v627, 4
        %v708 = vrot.slane %v629, 4
        %711 = vrot.lane.b32.xlu0 %v707, 113
        %v712 = vpop.permute.xlu0 %711
        %713 = vrot.lane.b32.xlu0 %v708, 113
        %v714 = vpop.permute.xlu0 %713
        %v715 = vsel %vm379, %v712, %v714
        %v716 = vsel %vm379, %v714, %v712
        %v717 = vsel %vm384, %v715, 0.0
        %v718 = vsel %vm385, %v716, 0.0
        %v719 = vadd.f32 %v705, %v717
        %v720 = vadd.f32 %v706, %v718
        %v721 = vrot.slane %v627, 6
        %v722 = vrot.slane %v629, 6
        %725 = vrot.lane.b32.xlu0 %v721, 112
        %v726 = vpop.permute.xlu0 %725
        %727 = vrot.lane.b32.xlu0 %v722, 112
        %v728 = vpop.permute.xlu0 %727
        %v729 = vsel %vm392, %v726, %v728
        %v730 = vsel %vm392, %v728, %v726
        %v731 = vsel %vm397, %v729, 0.0
        %v732 = vsel %vm398, %v730, 0.0
        %v733 = vadd.f32 %v719, %v731
        %v734 = vadd.f32 %v720, %v732
        %735 = vrot.lane.b32.xlu0 %v633, 111
        %v736 = vpop.permute.xlu0 %735
        %737 = vrot.lane.b32.xlu0 %v635, 111
        %v738 = vpop.permute.xlu0 %737
        %v739 = vsel %vm405, %v736, %v738
        %v740 = vsel %vm405, %v738, %v736
        %v741 = vsel %vm410, %v739, 0.0
        %v742 = vsel %vm411, %v740, 0.0
        %v743 = vadd.f32 %v733, %v741
        %v744 = vadd.f32 %v734, %v742
        %746 = vset.pattern.permute.xlu0 0
        %747 = vperm.xlu0 %746, %v307
        %v748 = vpop.permute.xlu0 %747
        %v750 = vadd.f32 %v743, %v748
        %v751 = vadd.f32 %v744, %v748
        %v754 = vcombine.low %v750, %v751
        %v756 = vunpack.c.l.s4 1983009808
        %v757 = vunpack.c.0.s8 %v756
        %v758 = vlaneseq
        %v759 = vshrl.u32 %v758, 7
        %v760 = vsub.s32 %v757, %v759
        %v761 = vrot.slane %v754, %v760
        %763 = vst [vmem:[%s247] sm:$0xf] %v761
        %s764 = sand.u32 %s139, 1
        %s765 = scalar_lea.sflag [#allocation4], %s764
        %s766 = sand.u32 %s139, 1
        %s767 = smul.addr %s766, 4
        %s768 = scalar_lea.vmem [#allocation7], %s767
        // Predicated region
        $region49: #{tpu_custom_call.1} parent=39 // pred_check
          %p769 = pneg %p149
        $region50: #{tpu_custom_call.1} parent=39 // pred_check_branch
          %771 = sbr.rel (%p769) target = $region52
        $region51: #{tpu_custom_call.1} parent=39 // pred_region
          %s773 = ssub.s32 64, 64
          %774 = vsyncadd %s765, %s773
          %s775 = smul.addr %s21, 2
          %s776 = smul.addr %s775, 32
          %s777 = scalar_lea.hbm %s5, %s776
          %s779 = sshll.u32 %s768, 4
          %s780 = int_to_ptr.vmem [resolvable:$true] %s779
          %782 = dma.vmem_to_hbm [thread:$0]  %s780, 64, %s777, %s765
        $region52: #{tpu_custom_call.1} parent=39 // pred_fallthru
          _
      $region40: #{tpu_custom_call.1} parent=5 // pred_fallthru
        _
      %p783 = scmp.le.s32.totalorder 2, %s16
      // Predicated region
      $region53: #{tpu_custom_call.1} parent=5 // pred_check
        %p784 = pneg %p783
      $region54: #{tpu_custom_call.1} parent=5 // pred_check_branch
        %786 = sbr.rel (%p784) target = $region56
      $region55: #{tpu_custom_call.1} parent=5 // pred_region
        %s787 = ssub.s32 %s16, 2
        // Predicated region
        $region57: #{tpu_custom_call.1} parent=55 // pred_check
          %p788 = pneg %p155
        $region58: #{tpu_custom_call.1} parent=55 // pred_check_branch
          %790 = sbr.rel (%p788) target = $region60
        $region59: #{tpu_custom_call.1} parent=55 // pred_region
          %s791 = sand.u32 %s140, 1
          %s792 = scalar_lea.sflag [#allocation4], %s791
          %s793 = sand.u32 %s140, 1
          %s794 = smul.addr %s793, 4
          %s795 = scalar_lea.vmem [#allocation7], %s794
          %796 = dma.done %s792, 64
        $region60: #{tpu_custom_call.1} parent=55 // pred_fallthru
          _
      $region56: #{tpu_custom_call.1} parent=5 // pred_fallthru
        _
    $region6: #{tpu_custom_call.1} parent=1 // loop_footer
      %s20 = sadd.s32 1, %s16
    $region7: #{tpu_custom_call.1} parent=1 // loop_footer_branch
      %15 = sbr.rel target = $region3
    $region8: #{tpu_custom_call.1} parent=1 // loop_exit
      _
    %797 = vsyncpa [#allocation3], 1
    %s798 = scalar_lea.sflag [#allocation3], 1
    %799 = vsyncpa %s798, 1
    %800 = vsyncpa [#allocation6], 1
    %801 = vsyncpa [#allocation4], 1
    %s802 = scalar_lea.sflag [#allocation4], 1
    %803 = vsyncpa %s802, 1

</llo_original>
